<compile_context>
chip_gen: v7x
topology: tpu7x:2x2x1
jax: 0.10.0
libtpu: 0.0.40
codegen_flags: <defaults>
</compile_context>

<pallas_src>
import functools

import jax
import jax.numpy as jnp
from jax.experimental import pallas as pl
from jax.experimental.pallas import tpu as pltpu

LANE = 128      # lane width: only the final (DMA'd) output dim is padded to this
SUBLANE = 8     # sublane: batch-tile granularity


def _round_up(n, m):
    return ((n + m - 1) // m) * m


# ----------------------------------------------------------------------------
# Pallas kernel: the full MLP for one batch tile.
# ----------------------------------------------------------------------------
def _fused_mlp_kernel(x_ref, *refs, activation):
    """refs = (w0, b0, w1, b1, ..., w_{L-1}, b_{L-1}, o_ref)

    x_ref : (TM, 784)       w_l : (K_l, N_l)       b_l : (1, N_l)
    o_ref : (TM, 128)       (only the last layer's N is lane-padded)
    """
    o_ref = refs[-1]
    wb = refs[:-1]
    n_layers = len(wb) // 2

    h = x_ref[...]
    for l in range(n_layers):
        w = wb[2 * l][...]
        b = wb[2 * l + 1][...]
        # MXU matmul with f32 accumulation; bias add in f32.
        y = jnp.dot(h.astype(w.dtype), w, preferred_element_type=jnp.float32)
        y = y + b.astype(jnp.float32)

        if l < n_layers - 1:          # hidden layer -> activation
            if activation == "relu":
                y = jnp.maximum(y, 0.0)
            elif activation == "sigmoid":
                y = jax.nn.sigmoid(y)
            elif activation == "softmax":
                # Hidden widths are exact (no padded lanes), so this is an
                # exact softmax over the true features (== nn.Softmax(dim=1)).
                y = y - jnp.max(y, axis=-1, keepdims=True)
                e = jnp.exp(y)
                y = e / jnp.sum(e, axis=-1, keepdims=True)
            # any other string -> no activation (matches the PyTorch `match`)
        h = y
    o_ref[...] = h.astype(o_ref.dtype)


# ----------------------------------------------------------------------------
# Parameter packing (done ONCE, outside the forward hot path).
# ----------------------------------------------------------------------------
def pack_params(params, dtype=jnp.float32):
    """PyTorch-style [(w(out,in), b(out)), ...] -> pre-transposed
    [(wT(in, out_or_pad), b(1, out_or_pad)), ...].

    Only the LAST layer's output dim is padded (to 128) so the kernel
    writeback is a lane-dense unmasked store; hidden widths stay exact
    (they live only in-kernel and never touch HBM)."""
    packed = []
    n_layers = len(params)
    for idx, (w, b) in enumerate(params):
        n_out, n_in = w.shape
        n_pad = _round_up(n_out, LANE) if idx == n_layers - 1 else n_out
        w_t = (jnp.zeros((n_in, n_pad), dtype)
               .at[:, :n_out].set(w.T.astype(dtype)))
        b_p = (jnp.zeros((1, n_pad), dtype)
               .at[:, :n_out].set(b.astype(dtype)))
        packed.append((w_t, b_p))
    n_out_true = params[-1][0].shape[0]
    return packed, n_out_true


# ----------------------------------------------------------------------------
# Forward pass: flatten (no copy, no pad), one fused pallas_call, slice logits.
# ----------------------------------------------------------------------------
def mlp_forward(x, packed_params, n_out_true, activation, *, max_tm=512):
    B = x.shape[0]
    h = x.reshape(B, -1)                      # nn.Flatten()
    K = h.shape[1]
    assert packed_params[0][0].shape[0] == K, "input features != layer-0 fan-in"
    N_out_pad = packed_params[-1][0].shape[1]

    # Batch tile: multiple of 8, capped at max_tm, and chosen so there are at
    # least 2 grid steps whenever B > 8 (v7x: shard the batch over both TCs).
    if B > SUBLANE:
        tm = min(max_tm, _round_up(pl.cdiv(B, 2), SUBLANE))
    else:
        tm = SUBLANE
    grid = pl.cdiv(B, tm)   # last block may be partial; OOB rows only reach
                            # output rows >= B, which Pallas clips on writeback.

    const_map = lambda i: (0, 0)              # weights stay VMEM-resident
    in_specs = [pl.BlockSpec((tm, K), lambda i: (i, 0))]   # batch tile of x
    flat_wb = []
    for (w_t, b_p) in packed_params:
        flat_wb += [w_t, b_p]
        # Grid-invariant operands: single-buffered (double buffering is waste).
        in_specs.append(pl.BlockSpec(w_t.shape, const_map,
                                     pipeline_mode=pl.Buffered(1)))
        in_specs.append(pl.BlockSpec(b_p.shape, const_map,
                                     pipeline_mode=pl.Buffered(1)))

    kernel = functools.partial(_fused_mlp_kernel, activation=activation)

    out = pl.pallas_call(
        kernel,
        out_shape=jax.ShapeDtypeStruct((B, N_out_pad), jnp.float32),
        grid_spec=pltpu.PrefetchScalarGridSpec(
            num_scalar_prefetch=0,
            grid=(grid,),
            in_specs=in_specs,
            out_specs=pl.BlockSpec((tm, N_out_pad), lambda i: (i, 0)),
        ),
        compiler_params=pltpu.CompilerParams(
            dimension_semantics=("parallel",),
            # Default scoped VMEM (16 MiB on v5e) is plenty at tm<=512 f32;
            # set vmem_limit_bytes here if max_tm is pushed past ~1024.
        ),
    )(h, *flat_wb)

    return out[:, :n_out_true]


# ----------------------------------------------------------------------------
# Reference / init helpers.
# ----------------------------------------------------------------------------
def _reference_mlp(x, params, activation):
    h = x.reshape(x.shape[0], -1)
    for idx, (w, b) in enumerate(params):
        h = h @ w.T + b
        if idx < len(params) - 1:
            if activation == "relu":
                h = jnp.maximum(h, 0.0)
            elif activation == "sigmoid":
                h = jax.nn.sigmoid(h)
            elif activation == "softmax":
                h = jax.nn.softmax(h, axis=1)
    return h


def init_mlp_params(key, hidden_layers, hidden_sizes):
    """PyTorch nn.Linear default init: U(-1/sqrt(fan_in), 1/sqrt(fan_in))."""
    params = []
    input_size = 28 * 28
    dims = list(hidden_sizes[:hidden_layers]) + [10]
    for out_size in dims:
        key, kw, kb = jax.random.split(key, 3)
        bound = 1.0 / jnp.sqrt(jnp.float32(input_size))
        w = jax.random.uniform(kw, (out_size, input_size), jnp.float32,
                               minval=-bound, maxval=bound)
        b = jax.random.uniform(kb, (out_size,), jnp.float32,
                               minval=-bound, maxval=bound)
        params.append((w, b))
        input_size = out_size
    return params


if __name__ == "__main__":
    hidden_layers = 2
    hidden_sizes = [128, 64]
    activation_fn = "relu"

    key = jax.random.PRNGKey(0)
    key, kx1, kx2 = jax.random.split(key, 3)

    params = init_mlp_params(key, hidden_layers, hidden_sizes)
    packed, n_out_true = pack_params(params)     # done once, not per-forward

    # Small MNIST-like NCHW batch.
    x1 = jax.random.normal(kx1, (2, 1, 28, 28), dtype=jnp.float32)
    out1 = jax.block_until_ready(
        mlp_forward(x1, packed, n_out_true, activation_fn))
    ref1 = _reference_mlp(x1, params, activation_fn)
    assert out1.shape == (2, 10)
    assert jnp.allclose(out1, ref1, atol=1e-4, rtol=1e-4)

    # Batch that is NOT a multiple of the tile: exercises the multi-step grid
    # (both TCs on v7x) and the partial out-of-bounds last block.
    x2 = jax.random.normal(kx2, (19, 1, 28, 28), dtype=jnp.float32)
    out2 = jax.block_until_ready(
        mlp_forward(x2, packed, n_out_true, activation_fn))
    ref2 = _reference_mlp(x2, params, activation_fn)
    assert out2.shape == (19, 10)
    assert jnp.allclose(out2, ref2, atol=1e-4, rtol=1e-4)

    print("KERNEL_OK")
</pallas_src>

<mosaic_0001>
module attributes {stable_mosaic.version = 11 : i64} {
  func.func @_fused_mlp_kernel(%arg0: i32, %arg1: memref<8x784xf32, #tpu.memory_space<vmem>>, %arg2: memref<784x128xf32, #tpu.memory_space<vmem>>, %arg3: memref<1x128xf32, #tpu.memory_space<vmem>>, %arg4: memref<128x64xf32, #tpu.memory_space<vmem>>, %arg5: memref<1x64xf32, #tpu.memory_space<vmem>>, %arg6: memref<64x128xf32, #tpu.memory_space<vmem>>, %arg7: memref<1x128xf32, #tpu.memory_space<vmem>>, %arg8: memref<8x128xf32, #tpu.memory_space<vmem>>) attributes {dimension_semantics = [#tpu.dimension_semantics<parallel>], iteration_bounds = array<i64: 1>, scalar_prefetch = 0 : i64, scratch_operands = 0 : i64, tpu.core_type = #tpu.core_type<tc>, window_params = [{transform_indices = @transform_0, window_bounds = array<i64: 8, 784>}, {pipeline_mode = #tpu.pipeline_mode<synchronous>, transform_indices = @transform_1, window_bounds = array<i64: 784, 128>}, {pipeline_mode = #tpu.pipeline_mode<synchronous>, transform_indices = @transform_2, window_bounds = array<i64: 1, 128>}, {pipeline_mode = #tpu.pipeline_mode<synchronous>, transform_indices = @transform_3, window_bounds = array<i64: 128, 64>}, {pipeline_mode = #tpu.pipeline_mode<synchronous>, transform_indices = @transform_4, window_bounds = array<i64: 1, 64>}, {pipeline_mode = #tpu.pipeline_mode<synchronous>, transform_indices = @transform_5, window_bounds = array<i64: 64, 128>}, {pipeline_mode = #tpu.pipeline_mode<synchronous>, transform_indices = @transform_6, window_bounds = array<i64: 1, 128>}, {transform_indices = @transform_7, window_bounds = array<i64: 8, 128>}]} {
    %c0 = arith.constant 0 : index
    %c0_0 = arith.constant 0 : index
    %0 = vector.load %arg1[%c0, %c0_0] : memref<8x784xf32, #tpu.memory_space<vmem>>, vector<8x784xf32>
    %c0_1 = arith.constant 0 : index
    %c0_2 = arith.constant 0 : index
    %1 = vector.load %arg2[%c0_1, %c0_2] : memref<784x128xf32, #tpu.memory_space<vmem>>, vector<784x128xf32>
    %c0_3 = arith.constant 0 : index
    %c0_4 = arith.constant 0 : index
    %2 = vector.load %arg3[%c0_3, %c0_4] : memref<1x128xf32, #tpu.memory_space<vmem>>, vector<1x128xf32>
    %cst = arith.constant dense<0.000000e+00> : vector<8x128xf32>
    %3 = tpu.matmul %0, %1, %cst {dimension_numbers = #tpu.dot_dimension_numbers<[1], [0], [0], [1], [0, 0, 1, 1], [], []>} : vector<8x784xf32>, vector<784x128xf32>, vector<8x128xf32> -> vector<8x128xf32>
    %4 = vector.broadcast %2 : vector<1x128xf32> to vector<8x128xf32>
    %5 = arith.addf %3, %4 : vector<8x128xf32>
    %cst_5 = arith.constant 0.000000e+00 : f32
    %6 = vector.broadcast %cst_5 : f32 to vector<8x128xf32>
    %7 = arith.maximumf %5, %6 : vector<8x128xf32>
    %c0_6 = arith.constant 0 : index
    %c0_7 = arith.constant 0 : index
    %8 = vector.load %arg4[%c0_6, %c0_7] : memref<128x64xf32, #tpu.memory_space<vmem>>, vector<128x64xf32>
    %c0_8 = arith.constant 0 : index
    %c0_9 = arith.constant 0 : index
    %9 = vector.load %arg5[%c0_8, %c0_9] : memref<1x64xf32, #tpu.memory_space<vmem>>, vector<1x64xf32>
    %cst_10 = arith.constant dense<0.000000e+00> : vector<8x64xf32>
    %10 = tpu.matmul %7, %8, %cst_10 {dimension_numbers = #tpu.dot_dimension_numbers<[1], [0], [0], [1], [0, 0, 1, 1], [], []>} : vector<8x128xf32>, vector<128x64xf32>, vector<8x64xf32> -> vector<8x64xf32>
    %11 = vector.broadcast %9 : vector<1x64xf32> to vector<8x64xf32>
    %12 = arith.addf %10, %11 : vector<8x64xf32>
    %cst_11 = arith.constant 0.000000e+00 : f32
    %13 = vector.broadcast %cst_11 : f32 to vector<8x64xf32>
    %14 = arith.maximumf %12, %13 : vector<8x64xf32>
    %c0_12 = arith.constant 0 : index
    %c0_13 = arith.constant 0 : index
    %15 = vector.load %arg6[%c0_12, %c0_13] : memref<64x128xf32, #tpu.memory_space<vmem>>, vector<64x128xf32>
    %c0_14 = arith.constant 0 : index
    %c0_15 = arith.constant 0 : index
    %16 = vector.load %arg7[%c0_14, %c0_15] : memref<1x128xf32, #tpu.memory_space<vmem>>, vector<1x128xf32>
    %cst_16 = arith.constant dense<0.000000e+00> : vector<8x128xf32>
    %17 = tpu.matmul %14, %15, %cst_16 {dimension_numbers = #tpu.dot_dimension_numbers<[1], [0], [0], [1], [0, 0, 1, 1], [], []>} : vector<8x64xf32>, vector<64x128xf32>, vector<8x128xf32> -> vector<8x128xf32>
    %18 = vector.broadcast %16 : vector<1x128xf32> to vector<8x128xf32>
    %19 = arith.addf %17, %18 : vector<8x128xf32>
    %c0_17 = arith.constant 0 : index
    %c0_18 = arith.constant 0 : index
    %20 = vector.load %arg8[%c0_17, %c0_18] : memref<8x128xf32, #tpu.memory_space<vmem>>, vector<8x128xf32>
    tpu.vector_store %arg8[%c0_17, %c0_18], %19 {strides = array<i32>} : memref<8x128xf32, #tpu.memory_space<vmem>>, vector<8x128xf32>,
    return
  }
  func.func @transform_0(%arg0: i32) -> (i32, i32) {
    %c0_i32 = arith.constant 0 : i32
    %c0_i32_0 = arith.constant 0 : i32
    return %arg0, %c0_i32 : i32, i32
  }
  func.func @transform_1(%arg0: i32) -> (i32, i32) {
    %c0_i32 = arith.constant 0 : i32
    %c0_i32_0 = arith.constant 0 : i32
    %c0_i32_1 = arith.constant 0 : i32
    return %c0_i32, %c0_i32_0 : i32, i32
  }
  func.func @transform_2(%arg0: i32) -> (i32, i32) {
    %c0_i32 = arith.constant 0 : i32
    %c0_i32_0 = arith.constant 0 : i32
    %c0_i32_1 = arith.constant 0 : i32
    return %c0_i32, %c0_i32_0 : i32, i32
  }
  func.func @transform_3(%arg0: i32) -> (i32, i32) {
    %c0_i32 = arith.constant 0 : i32
    %c0_i32_0 = arith.constant 0 : i32
    %c0_i32_1 = arith.constant 0 : i32
    return %c0_i32, %c0_i32_0 : i32, i32
  }
  func.func @transform_4(%arg0: i32) -> (i32, i32) {
    %c0_i32 = arith.constant 0 : i32
    %c0_i32_0 = arith.constant 0 : i32
    %c0_i32_1 = arith.constant 0 : i32
    return %c0_i32, %c0_i32_0 : i32, i32
  }
  func.func @transform_5(%arg0: i32) -> (i32, i32) {
    %c0_i32 = arith.constant 0 : i32
    %c0_i32_0 = arith.constant 0 : i32
    %c0_i32_1 = arith.constant 0 : i32
    return %c0_i32, %c0_i32_0 : i32, i32
  }
  func.func @transform_6(%arg0: i32) -> (i32, i32) {
    %c0_i32 = arith.constant 0 : i32
    %c0_i32_0 = arith.constant 0 : i32
    %c0_i32_1 = arith.constant 0 : i32
    return %c0_i32, %c0_i32_0 : i32, i32
  }
  func.func @transform_7(%arg0: i32) -> (i32, i32) {
    %c0_i32 = arith.constant 0 : i32
    %c0_i32_0 = arith.constant 0 : i32
    return %arg0, %c0_i32 : i32, i32
  }
}

</mosaic_0001>

<llo_original>
// kernel: tpu_custom_call.1
$region0: #{tpu_custom_call.1}
  #allocation0 [shape = 'u32[]', space=smem, size = 0x4, offset = 0x4, fixed_abs, tag = 'smem constant byte address 0x4 - core index']
  #allocation1 [shape = 'u32[144,128]{1,0:T(1,128)}', space=vmem, size = 0x12000, scoped, tag = 'internal scratch']
  %s0 = inlined_call_operand.vmem [shape: f32[2,784], index: 0, kind: input, shape index: {}]
  %s1 = inlined_call_operand.hbm [shape: f32[784,128], index: 1, kind: input, shape index: {}]
  %s2 = inlined_call_operand.vmem [shape: f32[1,128], index: 2, kind: input, shape index: {}]
  %s3 = inlined_call_operand.vmem [shape: f32[128,64], index: 3, kind: input, shape index: {}]
  %s4 = inlined_call_operand.vmem [shape: f32[1,64], index: 4, kind: input, shape index: {}]
  %s5 = inlined_call_operand.vmem [shape: f32[64,128], index: 5, kind: input, shape index: {}]
  %s6 = inlined_call_operand.vmem [shape: f32[1,128], index: 6, kind: input, shape index: {}]
  %s7 = inlined_call_operand.hbm [shape: f32[2,128], index: 7, kind: output, shape index: {}]
  %s8 = sld [smem:[#allocation0]]
  $region42: #{tpu_custom_call.1} parent=0
    _
  %s10 = ssub.s32 1, %s8
  %s11 = scalar_select 0, %s10, %s8
  $region1: #{tpu_custom_call.1} parent=0
    #allocation2 [shape = 'u8[401408]{0}', space=vmem, size = 0x62000, scoped, tag = 'input window, operand 1, single buffered']
    #allocation3 [shape = 's32[1]{0}', space=sflag, size = 0x4, scoped, tag = 'scoped memory for tpu_custom_call.1']
    #allocation4 [shape = 's32[1]{0}', space=sflag, size = 0x4, scoped, tag = 'scoped memory for tpu_custom_call.1']
    #allocation5 [shape = 'u8[4096]{0}', space=vmem, size = 0x1000, scoped, tag = 'output window, operand 0, single buffered']
    %12 = vsyncpa [#allocation3], 0
    %13 = vsyncpa [#allocation4], 0
    // Predicated region
    $region2: #{tpu_custom_call.1} parent=1 // pred_check
      _
    $region3: #{tpu_custom_call.1} parent=1 // pred_check_branch
      %15 = sbr.rel (0) target = $region5
    $region4: #{tpu_custom_call.1} parent=1 // pred_region
      _
    $region5: #{tpu_custom_call.1} parent=1 // pred_fallthru
      _
    // Predicated region
    $region6: #{tpu_custom_call.1} parent=1 // pred_check
      _
    $region7: #{tpu_custom_call.1} parent=1 // pred_check_branch
      %17 = sbr.rel (0) target = $region9
    $region8: #{tpu_custom_call.1} parent=1 // pred_region
      %s19 = ssub.s32 12544, 12544
      %20 = vsyncadd [#allocation3], %s19
      %s21 = sshll.u32 [#allocation2], 4
      %s22 = int_to_ptr.vmem [resolvable:$true] %s21
      %27 = dma.hbm_to_vmem [thread:$0]  %s1, 12544, %s22, [#allocation3], 128, 128, 8
    $region9: #{tpu_custom_call.1} parent=1 // pred_fallthru
      _
    // Predicated region
    $region10: #{tpu_custom_call.1} parent=1 // pred_check
      _
    $region11: #{tpu_custom_call.1} parent=1 // pred_check_branch
      %29 = sbr.rel (0) target = $region13
    $region12: #{tpu_custom_call.1} parent=1 // pred_region
      _
    $region13: #{tpu_custom_call.1} parent=1 // pred_fallthru
      _
    // Predicated region
    $region14: #{tpu_custom_call.1} parent=1 // pred_check
      _
    $region15: #{tpu_custom_call.1} parent=1 // pred_check_branch
      %31 = sbr.rel (0) target = $region17
    $region16: #{tpu_custom_call.1} parent=1 // pred_region
      _
    $region17: #{tpu_custom_call.1} parent=1 // pred_fallthru
      _
    // Predicated region
    $region18: #{tpu_custom_call.1} parent=1 // pred_check
      _
    $region19: #{tpu_custom_call.1} parent=1 // pred_check_branch
      %33 = sbr.rel (0) target = $region21
    $region20: #{tpu_custom_call.1} parent=1 // pred_region
      _
    $region21: #{tpu_custom_call.1} parent=1 // pred_fallthru
      _
    // Predicated region
    $region22: #{tpu_custom_call.1} parent=1 // pred_check
      _
    $region23: #{tpu_custom_call.1} parent=1 // pred_check_branch
      %35 = sbr.rel (0) target = $region25
    $region24: #{tpu_custom_call.1} parent=1 // pred_region
      _
    $region25: #{tpu_custom_call.1} parent=1 // pred_fallthru
      _
    // Predicated region
    $region26: #{tpu_custom_call.1} parent=1 // pred_check
      _
    $region27: #{tpu_custom_call.1} parent=1 // pred_check_branch
      %37 = sbr.rel (0) target = $region29
    $region28: #{tpu_custom_call.1} parent=1 // pred_region
      _
    $region29: #{tpu_custom_call.1} parent=1 // pred_fallthru
      _
    // Predicated region
    $region30: #{tpu_custom_call.1} parent=1 // pred_check
      _
    $region31: #{tpu_custom_call.1} parent=1 // pred_check_branch
      %39 = sbr.rel (0) target = $region33
    $region32: #{tpu_custom_call.1} parent=1 // pred_region
      %40 = dma.done [#allocation3], 12544
    $region33: #{tpu_custom_call.1} parent=1 // pred_fallthru
      _
    %v41 = vld [vmem:[%s0] sm:$0xff]
    %v42 = vld [vmem:[%s0 + $0x8] sm:$0x3f]
    %v43 = vld [vmem:[%s0 + $0xe] sm:$0xff]
    %v44 = vld [vmem:[%s0 + $0x16] sm:$0x3f]
    %v45 = vld [vmem:[%s0 + $0x1c] sm:$0xff]
    %v46 = vld [vmem:[%s0 + $0x24] sm:$0x3f]
    %v47 = vld [vmem:[%s0 + $0x2a] sm:$0xff]
    %v48 = vld [vmem:[%s0 + $0x32] sm:$0x3f]
    %v49 = vld [vmem:[#allocation2] sm:$0xff]
    %v50 = vld [vmem:[#allocation2 + $0x8] sm:$0xff]
    %v51 = vld [vmem:[#allocation2 + $0x10] sm:$0xff]
    %v52 = vld [vmem:[#allocation2 + $0x18] sm:$0xff]
    %v53 = vld [vmem:[#allocation2 + $0x20] sm:$0xff]
    %v54 = vld [vmem:[#allocation2 + $0x28] sm:$0xff]
    %v55 = vld [vmem:[#allocation2 + $0x30] sm:$0xff]
    %v56 = vld [vmem:[#allocation2 + $0x38] sm:$0xff]
    %v57 = vld [vmem:[#allocation2 + $0x40] sm:$0xff]
    %v58 = vld [vmem:[#allocation2 + $0x48] sm:$0xff]
    %v59 = vld [vmem:[#allocation2 + $0x50] sm:$0xff]
    %v60 = vld [vmem:[#allocation2 + $0x58] sm:$0xff]
    %v61 = vld [vmem:[#allocation2 + $0x60] sm:$0xff]
    %v62 = vld [vmem:[#allocation2 + $0x68] sm:$0xff]
    %v63 = vld [vmem:[#allocation2 + $0x70] sm:$0xff]
    %v64 = vld [vmem:[#allocation2 + $0x78] sm:$0xff]
    %v65 = vld [vmem:[#allocation2 + $0x80] sm:$0xff]
    %v66 = vld [vmem:[#allocation2 + $0x88] sm:$0xff]
    %v67 = vld [vmem:[#allocation2 + $0x90] sm:$0xff]
    %v68 = vld [vmem:[#allocation2 + $0x98] sm:$0xff]
    %v69 = vld [vmem:[#allocation2 + $0xa0] sm:$0xff]
    %v70 = vld [vmem:[#allocation2 + $0xa8] sm:$0xff]
    %v71 = vld [vmem:[#allocation2 + $0xb0] sm:$0xff]
    %v72 = vld [vmem:[#allocation2 + $0xb8] sm:$0xff]
    %v73 = vld [vmem:[#allocation2 + $0xc0] sm:$0xff]
    %v74 = vld [vmem:[#allocation2 + $0xc8] sm:$0xff]
    %v75 = vld [vmem:[#allocation2 + $0xd0] sm:$0xff]
    %v76 = vld [vmem:[#allocation2 + $0xd8] sm:$0xff]
    %v77 = vld [vmem:[#allocation2 + $0xe0] sm:$0xff]
    %v78 = vld [vmem:[#allocation2 + $0xe8] sm:$0xff]
    %v79 = vld [vmem:[#allocation2 + $0xf0] sm:$0xff]
    %v80 = vld [vmem:[#allocation2 + $0xf8] sm:$0xff]
    %v81 = vld [vmem:[#allocation2 + $0x100] sm:$0xff]
    %v82 = vld [vmem:[#allocation2 + $0x108] sm:$0xff]
    %v83 = vld [vmem:[#allocation2 + $0x110] sm:$0xff]
    %v84 = vld [vmem:[#allocation2 + $0x118] sm:$0xff]
    %v85 = vld [vmem:[#allocation2 + $0x120] sm:$0xff]
    %v86 = vld [vmem:[#allocation2 + $0x128] sm:$0xff]
    %v87 = vld [vmem:[#allocation2 + $0x130] sm:$0xff]
    %v88 = vld [vmem:[#allocation2 + $0x138] sm:$0xff]
    %v89 = vld [vmem:[#allocation2 + $0x140] sm:$0xff]
    %v90 = vld [vmem:[#allocation2 + $0x148] sm:$0xff]
    %v91 = vld [vmem:[#allocation2 + $0x150] sm:$0xff]
    %v92 = vld [vmem:[#allocation2 + $0x158] sm:$0xff]
    %v93 = vld [vmem:[#allocation2 + $0x160] sm:$0xff]
    %v94 = vld [vmem:[#allocation2 + $0x168] sm:$0xff]
    %v95 = vld [vmem:[#allocation2 + $0x170] sm:$0xff]
    %v96 = vld [vmem:[#allocation2 + $0x178] sm:$0xff]
    %v97 = vld [vmem:[#allocation2 + $0x180] sm:$0xff]
    %v98 = vld [vmem:[#allocation2 + $0x188] sm:$0xff]
    %v99 = vld [vmem:[#allocation2 + $0x190] sm:$0xff]
    %v100 = vld [vmem:[#allocation2 + $0x198] sm:$0xff]
    %v101 = vld [vmem:[#allocation2 + $0x1a0] sm:$0xff]
    %v102 = vld [vmem:[#allocation2 + $0x1a8] sm:$0xff]
    %v103 = vld [vmem:[#allocation2 + $0x1b0] sm:$0xff]
    %v104 = vld [vmem:[#allocation2 + $0x1b8] sm:$0xff]
    %v105 = vld [vmem:[#allocation2 + $0x1c0] sm:$0xff]
    %v106 = vld [vmem:[#allocation2 + $0x1c8] sm:$0xff]
    %v107 = vld [vmem:[#allocation2 + $0x1d0] sm:$0xff]
    %v108 = vld [vmem:[#allocation2 + $0x1d8] sm:$0xff]
    %v109 = vld [vmem:[#allocation2 + $0x1e0] sm:$0xff]
    %v110 = vld [vmem:[#allocation2 + $0x1e8] sm:$0xff]
    %v111 = vld [vmem:[#allocation2 + $0x1f0] sm:$0xff]
    %v112 = vld [vmem:[#allocation2 + $0x1f8] sm:$0xff]
    %v113 = vld [vmem:[#allocation2 + $0x200] sm:$0xff]
    %v114 = vld [vmem:[#allocation2 + $0x208] sm:$0xff]
    %v115 = vld [vmem:[#allocation2 + $0x210] sm:$0xff]
    %v116 = vld [vmem:[#allocation2 + $0x218] sm:$0xff]
    %v117 = vld [vmem:[#allocation2 + $0x220] sm:$0xff]
    %v118 = vld [vmem:[#allocation2 + $0x228] sm:$0xff]
    %v119 = vld [vmem:[#allocation2 + $0x230] sm:$0xff]
    %v120 = vld [vmem:[#allocation2 + $0x238] sm:$0xff]
    %v121 = vld [vmem:[#allocation2 + $0x240] sm:$0xff]
    %v122 = vld [vmem:[#allocation2 + $0x248] sm:$0xff]
    %v123 = vld [vmem:[#allocation2 + $0x250] sm:$0xff]
    %v124 = vld [vmem:[#allocation2 + $0x258] sm:$0xff]
    %v125 = vld [vmem:[#allocation2 + $0x260] sm:$0xff]
    %v126 = vld [vmem:[#allocation2 + $0x268] sm:$0xff]
    %v127 = vld [vmem:[#allocation2 + $0x270] sm:$0xff]
    %v128 = vld [vmem:[#allocation2 + $0x278] sm:$0xff]
    %v129 = vld [vmem:[#allocation2 + $0x280] sm:$0xff]
    %v130 = vld [vmem:[#allocation2 + $0x288] sm:$0xff]
    %v131 = vld [vmem:[#allocation2 + $0x290] sm:$0xff]
    %v132 = vld [vmem:[#allocation2 + $0x298] sm:$0xff]
    %v133 = vld [vmem:[#allocation2 + $0x2a0] sm:$0xff]
    %v134 = vld [vmem:[#allocation2 + $0x2a8] sm:$0xff]
    %v135 = vld [vmem:[#allocation2 + $0x2b0] sm:$0xff]
    %v136 = vld [vmem:[#allocation2 + $0x2b8] sm:$0xff]
    %v137 = vld [vmem:[#allocation2 + $0x2c0] sm:$0xff]
    %v138 = vld [vmem:[#allocation2 + $0x2c8] sm:$0xff]
    %v139 = vld [vmem:[#allocation2 + $0x2d0] sm:$0xff]
    %v140 = vld [vmem:[#allocation2 + $0x2d8] sm:$0xff]
    %v141 = vld [vmem:[#allocation2 + $0x2e0] sm:$0xff]
    %v142 = vld [vmem:[#allocation2 + $0x2e8] sm:$0xff]
    %v143 = vld [vmem:[#allocation2 + $0x2f0] sm:$0xff]
    %v144 = vld [vmem:[#allocation2 + $0x2f8] sm:$0xff]
    %v145 = vld [vmem:[#allocation2 + $0x300] sm:$0xff]
    %v146 = vld [vmem:[#allocation2 + $0x308] sm:$0xff]
    %v147 = vld [vmem:[%s2] sm:$0x1]
    %v149 = vlaneseq
    %v150 = vshrl.u32 %v149, 7
    %v151 = vsub.s32 0, %v150
    %v152 = vrot.slane %v147, %v151
    %v162 = vcombine.low %v41, %v43
    %v163 = vcombine.high %v41, %v43
    %v164 = vcombine.low %v45, %v47
    %v165 = vcombine.high %v45, %v47
    %v167 = vunpack.c.l.s4 1983009808
    %v168 = vunpack.c.0.s8 %v167
    %v169 = vlaneseq
    %v170 = vshrl.u32 %v169, 7
    %v171 = vsub.s32 %v168, %v170
    %v172 = vrot.slane %v162, %v171
    %v174 = vunpack.c.l.s4 1983009808
    %v175 = vunpack.c.0.s8 %v174
    %v176 = vlaneseq
    %v177 = vshrl.u32 %v176, 7
    %v178 = vsub.s32 %v175, %v177
    %v179 = vrot.slane %v163, %v178
    %v181 = vunpack.c.l.s4 1983009808
    %v182 = vunpack.c.0.s8 %v181
    %v183 = vlaneseq
    %v184 = vshrl.u32 %v183, 7
    %v185 = vsub.s32 %v182, %v184
    %v186 = vrot.slane %v164, %v185
    %v188 = vunpack.c.l.s4 1983009808
    %v189 = vunpack.c.0.s8 %v188
    %v190 = vlaneseq
    %v191 = vshrl.u32 %v190, 7
    %v192 = vsub.s32 %v189, %v191
    %v193 = vrot.slane %v165, %v192
    %v194 = vcombine.low %v172, %v186
    %v195 = vcombine.high %v172, %v186
    %v196 = vcombine.low %v179, %v193
    %v197 = vcombine.high %v179, %v193
    %v198 = vcombine.low %v42, %v44
    %v199 = vcombine.high %v42, %v44
    %v200 = vcombine.low %v46, %v48
    %v201 = vcombine.high %v46, %v48
    %v203 = vunpack.c.l.s4 1983009808
    %v204 = vunpack.c.0.s8 %v203
    %v205 = vlaneseq
    %v206 = vshrl.u32 %v205, 7
    %v207 = vsub.s32 %v204, %v206
    %v208 = vrot.slane %v198, %v207
    %v210 = vunpack.c.l.s4 1983009808
    %v211 = vunpack.c.0.s8 %v210
    %v212 = vlaneseq
    %v213 = vshrl.u32 %v212, 7
    %v214 = vsub.s32 %v211, %v213
    %v215 = vrot.slane %v199, %v214
    %v217 = vunpack.c.l.s4 1983009808
    %v218 = vunpack.c.0.s8 %v217
    %v219 = vlaneseq
    %v220 = vshrl.u32 %v219, 7
    %v221 = vsub.s32 %v218, %v220
    %v222 = vrot.slane %v200, %v221
    %v224 = vunpack.c.l.s4 1983009808
    %v225 = vunpack.c.0.s8 %v224
    %v226 = vlaneseq
    %v227 = vshrl.u32 %v226, 7
    %v228 = vsub.s32 %v225, %v227
    %v229 = vrot.slane %v201, %v228
    %v230 = vcombine.low %v208, %v222
    %v231 = vcombine.high %v208, %v222
    %v232 = vcombine.low %v215, %v229
    %vm239 = vcmask 130048
    %v240 = vsel %vm239, %v232, 0
    %242 = vmatprep.subr.mxu0 0.0
    %243 = vmatpush1.msra.mxu0 %v49
    %244 = vmatprep.subr.mxu0 0.0
    %245 = vmatpush1.msra.mxu0 %v50
    %246 = vmatprep.subr.mxu0 0.0
    %247 = vmatpush1.msra.mxu0 %v51
    %248 = vmatprep.subr.mxu0 0.0
    %249 = vmatpush1.msra.mxu0 %v52
    %250 = vmatprep.subr.mxu0 0.0
    %251 = vmatpush1.msra.mxu0 %v53
    %252 = vmatprep.subr.mxu0 0.0
    %253 = vmatpush1.msra.mxu0 %v54
    %254 = vmatprep.subr.mxu0 0.0
    %255 = vmatpush1.msra.mxu0 %v55
    %256 = vmatprep.subr.mxu0 0.0
    %257 = vmatpush1.msra.mxu0 %v56
    %258 = vmatprep.subr.mxu0 0.0
    %259 = vmatpush1.msra.mxu0 %v57
    %260 = vmatprep.subr.mxu0 0.0
    %261 = vmatpush1.msra.mxu0 %v58
    %262 = vmatprep.subr.mxu0 0.0
    %263 = vmatpush1.msra.mxu0 %v59
    %264 = vmatprep.subr.mxu0 0.0
    %265 = vmatpush1.msra.mxu0 %v60
    %266 = vmatprep.subr.mxu0 0.0
    %267 = vmatpush1.msra.mxu0 %v61
    %268 = vmatprep.subr.mxu0 0.0
    %269 = vmatpush1.msra.mxu0 %v62
    %270 = vmatprep.subr.mxu0 0.0
    %271 = vmatpush1.msra.mxu0 %v63
    %272 = vmatprep.subr.mxu0 0.0
    %273 = vmatpush1.msra.mxu0 %v64
    %274 = vmatprep.subr.mxu0 0.0
    %275 = vmatpush1.msra.mxu0 %v65
    %276 = vmatprep.subr.mxu0 0.0
    %277 = vmatpush1.msra.mxu0 %v66
    %278 = vmatprep.subr.mxu0 0.0
    %279 = vmatpush1.msra.mxu0 %v67
    %280 = vmatprep.subr.mxu0 0.0
    %281 = vmatpush1.msra.mxu0 %v68
    %282 = vmatprep.subr.mxu0 0.0
    %283 = vmatpush1.msra.mxu0 %v69
    %284 = vmatprep.subr.mxu0 0.0
    %285 = vmatpush1.msra.mxu0 %v70
    %286 = vmatprep.subr.mxu0 0.0
    %287 = vmatpush1.msra.mxu0 %v71
    %288 = vmatprep.subr.mxu0 0.0
    %289 = vmatpush1.msra.mxu0 %v72
    %290 = vmatprep.subr.mxu0 0.0
    %291 = vmatpush1.msra.mxu0 %v73
    %292 = vmatprep.subr.mxu0 0.0
    %293 = vmatpush1.msra.mxu0 %v74
    %294 = vmatprep.subr.mxu0 0.0
    %295 = vmatpush1.msra.mxu0 %v75
    %296 = vmatprep.subr.mxu0 0.0
    %297 = vmatpush1.msra.mxu0 %v76
    %298 = vmatprep.subr.mxu0 0.0
    %299 = vmatpush1.msra.mxu0 %v77
    %300 = vmatprep.subr.mxu0 0.0
    %301 = vmatpush1.msra.mxu0 %v78
    %302 = vmatprep.subr.mxu0 0.0
    %303 = vmatpush1.msra.mxu0 %v79
    %304 = vmatprep.subr.mxu0 0.0
    %305 = vmatpush1.msra.mxu0 %v80
    %306 = vmatprep.mubr.f32.mxu0 %v195
    %307 = vmatmul.mubr.f32.gmra.mrb[0].mxu0 %v194
    %v308 = vpop.f32.mrb[0].mxu0
    %v309 = vadd.f32 %v152, %v308
    %v310 = vpop.f32.mrb[0].mxu0
    %311 = vdwg.mxu0
    %312 = vmatprep.subr.mxu0 0.0
    %313 = vmatpush1.msra.mxu0 %v81
    %314 = vmatprep.subr.mxu0 0.0
    %315 = vmatpush1.msra.mxu0 %v82
    %316 = vmatprep.subr.mxu0 0.0
    %317 = vmatpush1.msra.mxu0 %v83
    %318 = vmatprep.subr.mxu0 0.0
    %319 = vmatpush1.msra.mxu0 %v84
    %320 = vmatprep.subr.mxu0 0.0
    %321 = vmatpush1.msra.mxu0 %v85
    %322 = vmatprep.subr.mxu0 0.0
    %323 = vmatpush1.msra.mxu0 %v86
    %324 = vmatprep.subr.mxu0 0.0
    %325 = vmatpush1.msra.mxu0 %v87
    %326 = vmatprep.subr.mxu0 0.0
    %327 = vmatpush1.msra.mxu0 %v88
    %328 = vmatprep.subr.mxu0 0.0
    %329 = vmatpush1.msra.mxu0 %v89
    %330 = vmatprep.subr.mxu0 0.0
    %331 = vmatpush1.msra.mxu0 %v90
    %332 = vmatprep.subr.mxu0 0.0
    %333 = vmatpush1.msra.mxu0 %v91
    %334 = vmatprep.subr.mxu0 0.0
    %335 = vmatpush1.msra.mxu0 %v92
    %336 = vmatprep.subr.mxu0 0.0
    %337 = vmatpush1.msra.mxu0 %v93
    %338 = vmatprep.subr.mxu0 0.0
    %339 = vmatpush1.msra.mxu0 %v94
    %340 = vmatprep.subr.mxu0 0.0
    %341 = vmatpush1.msra.mxu0 %v95
    %342 = vmatprep.subr.mxu0 0.0
    %343 = vmatpush1.msra.mxu0 %v96
    %344 = vmatprep.subr.mxu0 0.0
    %345 = vmatpush1.msra.mxu0 %v97
    %346 = vmatprep.subr.mxu0 0.0
    %347 = vmatpush1.msra.mxu0 %v98
    %348 = vmatprep.subr.mxu0 0.0
    %349 = vmatpush1.msra.mxu0 %v99
    %350 = vmatprep.subr.mxu0 0.0
    %351 = vmatpush1.msra.mxu0 %v100
    %352 = vmatprep.subr.mxu0 0.0
    %353 = vmatpush1.msra.mxu0 %v101
    %354 = vmatprep.subr.mxu0 0.0
    %355 = vmatpush1.msra.mxu0 %v102
    %356 = vmatprep.subr.mxu0 0.0
    %357 = vmatpush1.msra.mxu0 %v103
    %358 = vmatprep.subr.mxu0 0.0
    %359 = vmatpush1.msra.mxu0 %v104
    %360 = vmatprep.subr.mxu0 0.0
    %361 = vmatpush1.msra.mxu0 %v105
    %362 = vmatprep.subr.mxu0 0.0
    %363 = vmatpush1.msra.mxu0 %v106
    %364 = vmatprep.subr.mxu0 0.0
    %365 = vmatpush1.msra.mxu0 %v107
    %366 = vmatprep.subr.mxu0 0.0
    %367 = vmatpush1.msra.mxu0 %v108
    %368 = vmatprep.subr.mxu0 0.0
    %369 = vmatpush1.msra.mxu0 %v109
    %370 = vmatprep.subr.mxu0 0.0
    %371 = vmatpush1.msra.mxu0 %v110
    %372 = vmatprep.subr.mxu0 0.0
    %373 = vmatpush1.msra.mxu0 %v111
    %374 = vmatprep.subr.mxu0 0.0
    %375 = vmatpush1.msra.mxu0 %v112
    %376 = vmatprep.mubr.f32.mxu0 %v197
    %377 = vmatmul.mubr.f32.gmra.mrb[0].mxu0 %v196
    %v378 = vpop.f32.mrb[0].mxu0
    %v379 = vadd.f32 %v309, %v378
    %v380 = vpop.f32.mrb[0].mxu0
    %381 = vdwg.mxu0
    %382 = vmatprep.subr.mxu0 0.0
    %383 = vmatpush1.msra.mxu0 %v113
    %384 = vmatprep.subr.mxu0 0.0
    %385 = vmatpush1.msra.mxu0 %v114
    %386 = vmatprep.subr.mxu0 0.0
    %387 = vmatpush1.msra.mxu0 %v115
    %388 = vmatprep.subr.mxu0 0.0
    %389 = vmatpush1.msra.mxu0 %v116
    %390 = vmatprep.subr.mxu0 0.0
    %391 = vmatpush1.msra.mxu0 %v117
    %392 = vmatprep.subr.mxu0 0.0
    %393 = vmatpush1.msra.mxu0 %v118
    %394 = vmatprep.subr.mxu0 0.0
    %395 = vmatpush1.msra.mxu0 %v119
    %396 = vmatprep.subr.mxu0 0.0
    %397 = vmatpush1.msra.mxu0 %v120
    %398 = vmatprep.subr.mxu0 0.0
    %399 = vmatpush1.msra.mxu0 %v121
    %400 = vmatprep.subr.mxu0 0.0
    %401 = vmatpush1.msra.mxu0 %v122
    %402 = vmatprep.subr.mxu0 0.0
    %403 = vmatpush1.msra.mxu0 %v123
    %404 = vmatprep.subr.mxu0 0.0
    %405 = vmatpush1.msra.mxu0 %v124
    %406 = vmatprep.subr.mxu0 0.0
    %407 = vmatpush1.msra.mxu0 %v125
    %408 = vmatprep.subr.mxu0 0.0
    %409 = vmatpush1.msra.mxu0 %v126
    %410 = vmatprep.subr.mxu0 0.0
    %411 = vmatpush1.msra.mxu0 %v127
    %412 = vmatprep.subr.mxu0 0.0
    %413 = vmatpush1.msra.mxu0 %v128
    %414 = vmatprep.subr.mxu0 0.0
    %415 = vmatpush1.msra.mxu0 %v129
    %416 = vmatprep.subr.mxu0 0.0
    %417 = vmatpush1.msra.mxu0 %v130
    %418 = vmatprep.subr.mxu0 0.0
    %419 = vmatpush1.msra.mxu0 %v131
    %420 = vmatprep.subr.mxu0 0.0
    %421 = vmatpush1.msra.mxu0 %v132
    %422 = vmatprep.subr.mxu0 0.0
    %423 = vmatpush1.msra.mxu0 %v133
    %424 = vmatprep.subr.mxu0 0.0
    %425 = vmatpush1.msra.mxu0 %v134
    %426 = vmatprep.subr.mxu0 0.0
    %427 = vmatpush1.msra.mxu0 %v135
    %428 = vmatprep.subr.mxu0 0.0
    %429 = vmatpush1.msra.mxu0 %v136
    %430 = vmatprep.subr.mxu0 0.0
    %431 = vmatpush1.msra.mxu0 %v137
    %432 = vmatprep.subr.mxu0 0.0
    %433 = vmatpush1.msra.mxu0 %v138
    %434 = vmatprep.subr.mxu0 0.0
    %435 = vmatpush1.msra.mxu0 %v139
    %436 = vmatprep.subr.mxu0 0.0
    %437 = vmatpush1.msra.mxu0 %v140
    %438 = vmatprep.subr.mxu0 0.0
    %439 = vmatpush1.msra.mxu0 %v141
    %440 = vmatprep.subr.mxu0 0.0
    %441 = vmatpush1.msra.mxu0 %v142
    %442 = vmatprep.subr.mxu0 0.0
    %443 = vmatpush1.msra.mxu0 %v143
    %444 = vmatprep.subr.mxu0 0.0
    %445 = vmatpush1.msra.mxu0 %v144
    %446 = vmatprep.mubr.f32.mxu0 %v231
    %447 = vmatmul.mubr.f32.gmra.mrb[0].mxu0 %v230
    %v448 = vpop.f32.mrb[0].mxu0
    %v449 = vadd.f32 %v379, %v448
    %v450 = vpop.f32.mrb[0].mxu0
    %451 = vdwg.mxu0
    %452 = vmatprep.subr.mxu0 0.0
    %453 = vmatpush1.msra.mxu0 %v145
    %454 = vmatprep.subr.mxu0 0.0
    %455 = vmatpush1.msra.mxu0 %v146
    %456 = vmatprep.subr.mxu0 0.0
    %457 = vmatpush1.msra.mxu0 0.0
    %458 = vmatprep.subr.mxu0 0.0
    %459 = vmatpush1.msra.mxu0 0.0
    %460 = vmatprep.subr.mxu0 0.0
    %461 = vmatpush1.msra.mxu0 0.0
    %462 = vmatprep.subr.mxu0 0.0
    %463 = vmatpush1.msra.mxu0 0.0
    %464 = vmatprep.subr.mxu0 0.0
    %465 = vmatpush1.msra.mxu0 0.0
    %466 = vmatprep.subr.mxu0 0.0
    %467 = vmatpush1.msra.mxu0 0.0
    %468 = vmatprep.subr.mxu0 0.0
    %469 = vmatpush1.msra.mxu0 0.0
    %470 = vmatprep.subr.mxu0 0.0
    %471 = vmatpush1.msra.mxu0 0.0
    %472 = vmatprep.subr.mxu0 0.0
    %473 = vmatpush1.msra.mxu0 0.0
    %474 = vmatprep.subr.mxu0 0.0
    %475 = vmatpush1.msra.mxu0 0.0
    %476 = vmatprep.subr.mxu0 0.0
    %477 = vmatpush1.msra.mxu0 0.0
    %478 = vmatprep.subr.mxu0 0.0
    %479 = vmatpush1.msra.mxu0 0.0
    %480 = vmatprep.subr.mxu0 0.0
    %481 = vmatpush1.msra.mxu0 0.0
    %482 = vmatprep.subr.mxu0 0.0
    %483 = vmatpush1.msra.mxu0 0.0
    %484 = vmatprep.subr.mxu0 0.0
    %485 = vmatpush1.msra.mxu0 0.0
    %486 = vmatprep.subr.mxu0 0.0
    %487 = vmatpush1.msra.mxu0 0.0
    %488 = vmatprep.subr.mxu0 0.0
    %489 = vmatpush1.msra.mxu0 0.0
    %490 = vmatprep.subr.mxu0 0.0
    %491 = vmatpush1.msra.mxu0 0.0
    %492 = vmatprep.subr.mxu0 0.0
    %493 = vmatpush1.msra.mxu0 0.0
    %494 = vmatprep.subr.mxu0 0.0
    %495 = vmatpush1.msra.mxu0 0.0
    %496 = vmatprep.subr.mxu0 0.0
    %497 = vmatpush1.msra.mxu0 0.0
    %498 = vmatprep.subr.mxu0 0.0
    %499 = vmatpush1.msra.mxu0 0.0
    %500 = vmatprep.subr.mxu0 0.0
    %501 = vmatpush1.msra.mxu0 0.0
    %502 = vmatprep.subr.mxu0 0.0
    %503 = vmatpush1.msra.mxu0 0.0
    %504 = vmatprep.subr.mxu0 0.0
    %505 = vmatpush1.msra.mxu0 0.0
    %506 = vmatprep.subr.mxu0 0.0
    %507 = vmatpush1.msra.mxu0 0.0
    %508 = vmatprep.subr.mxu0 0.0
    %509 = vmatpush1.msra.mxu0 0.0
    %510 = vmatprep.subr.mxu0 0.0
    %511 = vmatpush1.msra.mxu0 0.0
    %512 = vmatprep.subr.mxu0 0.0
    %513 = vmatpush1.msra.mxu0 0.0
    %514 = vmatprep.subr.mxu0 0.0
    %515 = vmatpush1.msra.mxu0 0.0
    %516 = vmatprep.mubr.f32.mxu0 0.0
    %517 = vmatmul.mubr.f32.gmra.mrb[0].mxu0 %v240
    %v518 = vpop.f32.mrb[0].mxu0
    %v519 = vadd.f32 %v449, %v518
    %v520 = vpop.f32.mrb[0].mxu0
    %521 = vdwg.mxu0
    %v522 = vmax.f32 %v519, 0.0
    %v523 = vld [vmem:[%s3] sm:$0xff]
    %v524 = vld [vmem:[%s3 + $0x8] sm:$0xff]
    %v525 = vld [vmem:[%s3 + $0x10] sm:$0xff]
    %v526 = vld [vmem:[%s3 + $0x18] sm:$0xff]
    %v527 = vld [vmem:[%s3 + $0x20] sm:$0xff]
    %v528 = vld [vmem:[%s3 + $0x28] sm:$0xff]
    %v529 = vld [vmem:[%s3 + $0x30] sm:$0xff]
    %v530 = vld [vmem:[%s3 + $0x38] sm:$0xff]
    %v531 = vld [vmem:[%s3 + $0x40] sm:$0xff]
    %v532 = vld [vmem:[%s3 + $0x48] sm:$0xff]
    %v533 = vld [vmem:[%s3 + $0x50] sm:$0xff]
    %v534 = vld [vmem:[%s3 + $0x58] sm:$0xff]
    %v535 = vld [vmem:[%s3 + $0x60] sm:$0xff]
    %v536 = vld [vmem:[%s3 + $0x68] sm:$0xff]
    %v537 = vld [vmem:[%s3 + $0x70] sm:$0xff]
    %v538 = vld [vmem:[%s3 + $0x78] sm:$0xff]
    %v539 = vld [vmem:[%s4] sm:$0x1]
    %v541 = vlaneseq
    %v542 = vshrl.u32 %v541, 7
    %v543 = vsub.s32 0, %v542
    %v544 = vrot.slane %v539, %v543
    %546 = vmatprep.subr.mxu0 0.0
    %547 = vmatpush1.msra.mxu0 %v523
    %548 = vmatprep.subr.mxu0 0.0
    %549 = vmatpush1.msra.mxu0 %v524
    %550 = vmatprep.subr.mxu0 0.0
    %551 = vmatpush1.msra.mxu0 %v525
    %552 = vmatprep.subr.mxu0 0.0
    %553 = vmatpush1.msra.mxu0 %v526
    %554 = vmatprep.subr.mxu0 0.0
    %555 = vmatpush1.msra.mxu0 %v527
    %556 = vmatprep.subr.mxu0 0.0
    %557 = vmatpush1.msra.mxu0 %v528
    %558 = vmatprep.subr.mxu0 0.0
    %559 = vmatpush1.msra.mxu0 %v529
    %560 = vmatprep.subr.mxu0 0.0
    %561 = vmatpush1.msra.mxu0 %v530
    %562 = vmatprep.subr.mxu0 0.0
    %563 = vmatpush1.msra.mxu0 %v531
    %564 = vmatprep.subr.mxu0 0.0
    %565 = vmatpush1.msra.mxu0 %v532
    %566 = vmatprep.subr.mxu0 0.0
    %567 = vmatpush1.msra.mxu0 %v533
    %568 = vmatprep.subr.mxu0 0.0
    %569 = vmatpush1.msra.mxu0 %v534
    %570 = vmatprep.subr.mxu0 0.0
    %571 = vmatpush1.msra.mxu0 %v535
    %572 = vmatprep.subr.mxu0 0.0
    %573 = vmatpush1.msra.mxu0 %v536
    %574 = vmatprep.subr.mxu0 0.0
    %575 = vmatpush1.msra.mxu0 %v537
    %576 = vmatprep.subr.mxu0 0.0
    %577 = vmatpush1.msra.mxu0 %v538
    %578 = vmatprep.subr.mxu0 0.0
    %579 = vmatpush1.msra.mxu0 0.0
    %580 = vmatprep.subr.mxu0 0.0
    %581 = vmatpush1.msra.mxu0 0.0
    %582 = vmatprep.subr.mxu0 0.0
    %583 = vmatpush1.msra.mxu0 0.0
    %584 = vmatprep.subr.mxu0 0.0
    %585 = vmatpush1.msra.mxu0 0.0
    %586 = vmatprep.subr.mxu0 0.0
    %587 = vmatpush1.msra.mxu0 0.0
    %588 = vmatprep.subr.mxu0 0.0
    %589 = vmatpush1.msra.mxu0 0.0
    %590 = vmatprep.subr.mxu0 0.0
    %591 = vmatpush1.msra.mxu0 0.0
    %592 = vmatprep.subr.mxu0 0.0
    %593 = vmatpush1.msra.mxu0 0.0
    %594 = vmatprep.subr.mxu0 0.0
    %595 = vmatpush1.msra.mxu0 0.0
    %596 = vmatprep.subr.mxu0 0.0
    %597 = vmatpush1.msra.mxu0 0.0
    %598 = vmatprep.subr.mxu0 0.0
    %599 = vmatpush1.msra.mxu0 0.0
    %600 = vmatprep.subr.mxu0 0.0
    %601 = vmatpush1.msra.mxu0 0.0
    %602 = vmatprep.subr.mxu0 0.0
    %603 = vmatpush1.msra.mxu0 0.0
    %604 = vmatprep.subr.mxu0 0.0
    %605 = vmatpush1.msra.mxu0 0.0
    %606 = vmatprep.subr.mxu0 0.0
    %607 = vmatpush1.msra.mxu0 0.0
    %608 = vmatprep.subr.mxu0 0.0
    %609 = vmatpush1.msra.mxu0 0.0
    %610 = vmatprep.mubr.f32.mxu0 0.0
    %611 = vmatmul.mubr.f32.gmra.mrb[0].mxu0 %v522
    %v612 = vpop.f32.mrb[0].mxu0
    %v613 = vadd.f32 %v544, %v612
    %v614 = vpop.f32.mrb[0].mxu0
    %615 = vdwg.mxu0
    %v616 = vmax.f32 %v613, 0.0
    %v617 = vld [vmem:[%s5] sm:$0xff]
    %v618 = vld [vmem:[%s5 + $0x8] sm:$0xff]
    %v619 = vld [vmem:[%s5 + $0x10] sm:$0xff]
    %v620 = vld [vmem:[%s5 + $0x18] sm:$0xff]
    %v621 = vld [vmem:[%s5 + $0x20] sm:$0xff]
    %v622 = vld [vmem:[%s5 + $0x28] sm:$0xff]
    %v623 = vld [vmem:[%s5 + $0x30] sm:$0xff]
    %v624 = vld [vmem:[%s5 + $0x38] sm:$0xff]
    %v625 = vld [vmem:[%s6] sm:$0x1]
    %v627 = vlaneseq
    %v628 = vshrl.u32 %v627, 7
    %v629 = vsub.s32 0, %v628
    %v630 = vrot.slane %v625, %v629
    %vm632 = vcmask 523264
    %v634 = vsel %vm632, %v616, 0
    %636 = vmatprep.subr.mxu0 0.0
    %637 = vmatpush1.msra.mxu0 %v617
    %638 = vmatprep.subr.mxu0 0.0
    %639 = vmatpush1.msra.mxu0 %v618
    %640 = vmatprep.subr.mxu0 0.0
    %641 = vmatpush1.msra.mxu0 %v619
    %642 = vmatprep.subr.mxu0 0.0
    %643 = vmatpush1.msra.mxu0 %v620
    %644 = vmatprep.subr.mxu0 0.0
    %645 = vmatpush1.msra.mxu0 %v621
    %646 = vmatprep.subr.mxu0 0.0
    %647 = vmatpush1.msra.mxu0 %v622
    %648 = vmatprep.subr.mxu0 0.0
    %649 = vmatpush1.msra.mxu0 %v623
    %650 = vmatprep.subr.mxu0 0.0
    %651 = vmatpush1.msra.mxu0 %v624
    %652 = vmatprep.subr.mxu0 0.0
    %653 = vmatpush1.msra.mxu0 0.0
    %654 = vmatprep.subr.mxu0 0.0
    %655 = vmatpush1.msra.mxu0 0.0
    %656 = vmatprep.subr.mxu0 0.0
    %657 = vmatpush1.msra.mxu0 0.0
    %658 = vmatprep.subr.mxu0 0.0
    %659 = vmatpush1.msra.mxu0 0.0
    %660 = vmatprep.subr.mxu0 0.0
    %661 = vmatpush1.msra.mxu0 0.0
    %662 = vmatprep.subr.mxu0 0.0
    %663 = vmatpush1.msra.mxu0 0.0
    %664 = vmatprep.subr.mxu0 0.0
    %665 = vmatpush1.msra.mxu0 0.0
    %666 = vmatprep.subr.mxu0 0.0
    %667 = vmatpush1.msra.mxu0 0.0
    %668 = vmatprep.subr.mxu0 0.0
    %669 = vmatpush1.msra.mxu0 0.0
    %670 = vmatprep.subr.mxu0 0.0
    %671 = vmatpush1.msra.mxu0 0.0
    %672 = vmatprep.subr.mxu0 0.0
    %673 = vmatpush1.msra.mxu0 0.0
    %674 = vmatprep.subr.mxu0 0.0
    %675 = vmatpush1.msra.mxu0 0.0
    %676 = vmatprep.subr.mxu0 0.0
    %677 = vmatpush1.msra.mxu0 0.0
    %678 = vmatprep.subr.mxu0 0.0
    %679 = vmatpush1.msra.mxu0 0.0
    %680 = vmatprep.subr.mxu0 0.0
    %681 = vmatpush1.msra.mxu0 0.0
    %682 = vmatprep.subr.mxu0 0.0
    %683 = vmatpush1.msra.mxu0 0.0
    %684 = vmatprep.subr.mxu0 0.0
    %685 = vmatpush1.msra.mxu0 0.0
    %686 = vmatprep.subr.mxu0 0.0
    %687 = vmatpush1.msra.mxu0 0.0
    %688 = vmatprep.subr.mxu0 0.0
    %689 = vmatpush1.msra.mxu0 0.0
    %690 = vmatprep.subr.mxu0 0.0
    %691 = vmatpush1.msra.mxu0 0.0
    %692 = vmatprep.subr.mxu0 0.0
    %693 = vmatpush1.msra.mxu0 0.0
    %694 = vmatprep.subr.mxu0 0.0
    %695 = vmatpush1.msra.mxu0 0.0
    %696 = vmatprep.subr.mxu0 0.0
    %697 = vmatpush1.msra.mxu0 0.0
    %698 = vmatprep.subr.mxu0 0.0
    %699 = vmatpush1.msra.mxu0 0.0
    %700 = vmatprep.mubr.f32.mxu0 0.0
    %701 = vmatmul.mubr.f32.gmra.mrb[0].mxu0 %v634
    %v702 = vpop.f32.mrb[0].mxu0
    %v703 = vadd.f32 %v630, %v702
    %v704 = vpop.f32.mrb[0].mxu0
    %705 = vdwg.mxu0
    %706 = vst [vmem:[#allocation5] sm:$0xff] %v703
    // Predicated region
    $region34: #{tpu_custom_call.1} parent=1 // pred_check
      _
    $region35: #{tpu_custom_call.1} parent=1 // pred_check_branch
      %708 = sbr.rel (0) target = $region37
    $region36: #{tpu_custom_call.1} parent=1 // pred_region
      %s710 = ssub.s32 128, 32
      %711 = vsyncadd [#allocation4], %s710
      %s712 = sshll.u32 [#allocation5], 4
      %s713 = int_to_ptr.vmem [resolvable:$true] %s712
      %718 = dma.vmem_to_hbm [thread:$0]  %s713, 32, %s7, [#allocation4], 32, 32, 2
    $region37: #{tpu_custom_call.1} parent=1 // pred_fallthru
      _
    // Predicated region
    $region38: #{tpu_custom_call.1} parent=1 // pred_check
      _
    $region39: #{tpu_custom_call.1} parent=1 // pred_check_branch
      %720 = sbr.rel (0) target = $region41
    $region40: #{tpu_custom_call.1} parent=1 // pred_region
      %721 = dma.done [#allocation4], 128
    $region41: #{tpu_custom_call.1} parent=1 // pred_fallthru
      _
    %722 = vsyncpa [#allocation3], 1
    %723 = vsyncpa [#allocation4], 1

</llo_original>
